<compile_context>
chip_gen: v7x
topology: tpu7x:2x2x1
jax: 0.10.0
libtpu: 0.0.40
codegen_flags: <defaults>
</compile_context>

<pallas_src>
import jax
import jax.numpy as jnp
from jax.experimental import pallas as pl
from jax.experimental.pallas import tpu as pltpu

LANE = 128                 # lane width (last-dim alignment for dense stores)
GRIDLESS_MAX_BATCH = 1024  # single-block path up to this many rows
MAX_TILE_M = 4096          # per-step VMEM stays ~few MB (safe on v7x 32 MiB scoped)


def _round_up(n, m):
    return ((n + m - 1) // m) * m


def decoder_kernel(x_ref, w1_ref, b1_ref, w2_ref, b2_ref, o_ref):
    # Linear 1 + ReLU (MXU matmul, f32 accumulation; ReLU on the VPU).
    h = jnp.dot(x_ref[...], w1_ref[...], preferred_element_type=jnp.float32)
    h = jnp.maximum(h + b1_ref[...], 0.0)           # broadcast [1, Hp] over rows

    # Linear 2 + sigmoid (exp/recip on the EUP slot).
    y = jnp.dot(h, w2_ref[...], preferred_element_type=jnp.float32)
    o_ref[...] = jax.nn.sigmoid(y + b2_ref[...]).astype(o_ref.dtype)


def prepare_decoder_params(w1, b1, w2, b2):
    """One-time parameter prep (call at load time, NOT per forward).

    w1: [hidden, latent], b1: [hidden]   (PyTorch nn.Linear layout)
    w2: [out,    hidden], b2: [out]

    Returns a dict with pre-transposed, lane-padded weights:
      w1t: [latent, Hp]   (K left unpadded -- x streams unpadded)
      b1r: [1, Hp]
      w2t: [Hp, Np]
      b2r: [1, Np]
    Zero padding of hidden/output columns is exact: relu(0)=0 feeds zero
    columns of w2t, and padded output columns are sliced off by the wrapper.
    """
    hidden, latent = w1.shape
    out_dim = w2.shape[0]
    Hp = _round_up(hidden, LANE)
    Np = _round_up(out_dim, LANE)

    return dict(
        w1t=jnp.pad(w1.T, ((0, 0), (0, Hp - hidden))),
        b1r=jnp.pad(b1.reshape(1, hidden), ((0, 0), (0, Hp - hidden))),
        w2t=jnp.pad(w2.T, ((0, Hp - hidden), (0, Np - out_dim))),
        b2r=jnp.pad(b2.reshape(1, out_dim), ((0, 0), (0, Np - out_dim))),
        latent=latent, hidden=hidden, out_dim=out_dim, Hp=Hp, Np=Np,
    )


def decoder_apply(params, x):
    """Forward pass. x: [B, latent] -> [B, out_dim]."""
    B, latent = x.shape
    assert latent == params["latent"], "latent dim mismatch"
    hidden, out_dim, Np = params["hidden"], params["out_dim"], params["Np"]
    w1t, b1r, w2t, b2r = params["w1t"], params["b1r"], params["w2t"], params["b2r"]
    out_dtype = x.dtype

    # Cost estimate from TRUE (unpadded) dims so XLA doesn't over-weight this
    # micro-kernel in its schedule.
    cost = pl.CostEstimate(
        flops=2 * B * (latent * hidden + hidden * out_dim),
        transcendentals=B * out_dim,
        bytes_accessed=4 * (B * latent + w1t.size + b1r.size
                            + w2t.size + b2r.size + B * out_dim),
    )

    if B <= GRIDLESS_MAX_BATCH:
        # --- Small/medium batch: single full-VMEM block, no grid, no pipeline.
        Bp = _round_up(B, 8)                      # f32 sublane alignment
        xp = x if Bp == B else jnp.pad(x, ((0, Bp - B), (0, 0)))
        out_p = pl.pallas_call(
            decoder_kernel,
            out_shape=jax.ShapeDtypeStruct((Bp, Np), out_dtype),
            in_specs=[pl.BlockSpec(memory_space=pltpu.MemorySpace.VMEM)] * 5,
            out_specs=pl.BlockSpec(memory_space=pltpu.MemorySpace.VMEM),
            cost_estimate=cost,
        )(xp, w1t, b1r, w2t, b2r)
    else:
        # --- Large batch: tile over batch only, >=2 "parallel" steps so both
        # v7x TensorCores are used; weights/biases VMEM-resident across steps.
        tile_m = min(MAX_TILE_M, _round_up(pl.cdiv(B, 2), 256))
        Bp = _round_up(B, tile_m)
        xp = x if Bp == B else jnp.pad(x, ((0, Bp - B), (0, 0)))
        out_p = pl.pallas_call(
            decoder_kernel,
            out_shape=jax.ShapeDtypeStruct((Bp, Np), out_dtype),
            grid=(Bp // tile_m,),
            in_specs=[
                # x: streamed, tiled over batch, K (latent) UNPADDED.
                pl.BlockSpec((tile_m, latent), lambda i: (i, 0)),
                # weights / biases: constant index_map -> resident in VMEM.
                pl.BlockSpec(w1t.shape, lambda i: (0, 0)),
                pl.BlockSpec(b1r.shape, lambda i: (0, 0)),
                pl.BlockSpec(w2t.shape, lambda i: (0, 0)),
                pl.BlockSpec(b2r.shape, lambda i: (0, 0)),
            ],
            out_specs=pl.BlockSpec((tile_m, Np), lambda i: (i, 0)),
            compiler_params=pltpu.CompilerParams(
                dimension_semantics=("parallel",)),
            cost_estimate=cost,
        )(xp, w1t, b1r, w2t, b2r)

    # Slice only when padding actually occurred.
    if out_p.shape[0] != B or Np != out_dim:
        out_p = out_p[:B, :out_dim]
    return out_p


def decoder_forward(x, w1, b1, w2, b2):
    """Convenience wrapper taking raw PyTorch-layout parameters."""
    return decoder_apply(prepare_decoder_params(w1, b1, w2, b2), x)


def reference_forward(x, w1, b1, w2, b2):
    h = jnp.maximum(x @ w1.T + b1, 0.0)
    return jax.nn.sigmoid(h @ w2.T + b2)


if __name__ == "__main__":
    # Module hyper-parameters (small, forward-consistent shapes).
    batch = 8
    latent_dim = 16
    hidden_dim = 32
    output_dim = 64

    key = jax.random.PRNGKey(0)
    kx, kw1, kb1, kw2, kb2, kx2 = jax.random.split(key, 6)

    # Deterministic init (mimicking nn.Linear's uniform fan-in init),
    # kept in native PyTorch layout: weight [out_features, in_features].
    x = jax.random.normal(kx, (batch, latent_dim), dtype=jnp.float32)

    lim1 = 1.0 / (latent_dim ** 0.5)
    w1 = jax.random.uniform(kw1, (hidden_dim, latent_dim), jnp.float32, -lim1, lim1)
    b1 = jax.random.uniform(kb1, (hidden_dim,), jnp.float32, -lim1, lim1)

    lim2 = 1.0 / (hidden_dim ** 0.5)
    w2 = jax.random.uniform(kw2, (output_dim, hidden_dim), jnp.float32, -lim2, lim2)
    b2 = jax.random.uniform(kb2, (output_dim,), jnp.float32, -lim2, lim2)

    # One-time parameter prep (hoisted out of the per-call path).
    params = prepare_decoder_params(w1, b1, w2, b2)

    # --- Small-batch (grid-less) path.
    out = decoder_apply(params, x)
    out = jax.block_until_ready(out)
    ref = reference_forward(x, w1, b1, w2, b2)
    assert out.shape == (batch, output_dim)
    assert jnp.allclose(out, ref, atol=1e-5, rtol=1e-5)

    # --- Large-batch (batch-tiled, 2 parallel steps, resident-weight) path.
    big_batch = 4096
    x_big = jax.random.normal(kx2, (big_batch, latent_dim), dtype=jnp.float32)
    out_big = decoder_apply(params, x_big)
    out_big = jax.block_until_ready(out_big)
    ref_big = reference_forward(x_big, w1, b1, w2, b2)
    assert out_big.shape == (big_batch, output_dim)
    assert jnp.allclose(out_big, ref_big, atol=1e-5, rtol=1e-5)

    print("KERNEL_OK")
</pallas_src>

<mosaic_0001>
module attributes {stable_mosaic.version = 11 : i64} {
  func.func @decoder_kernel(%arg0: memref<8x16xf32, #tpu.memory_space<vmem>>, %arg1: memref<16x128xf32, #tpu.memory_space<vmem>>, %arg2: memref<1x128xf32, #tpu.memory_space<vmem>>, %arg3: memref<128x128xf32, #tpu.memory_space<vmem>>, %arg4: memref<1x128xf32, #tpu.memory_space<vmem>>, %arg5: memref<8x128xf32, #tpu.memory_space<vmem>>) attributes {dimension_semantics = [], scalar_prefetch = 0 : i64, scratch_operands = 0 : i64, tpu.core_type = #tpu.core_type<tc>} {
    %c0 = arith.constant 0 : index
    %c0_0 = arith.constant 0 : index
    %0 = vector.load %arg0[%c0, %c0_0] : memref<8x16xf32, #tpu.memory_space<vmem>>, vector<8x16xf32>
    %c0_1 = arith.constant 0 : index
    %c0_2 = arith.constant 0 : index
    %1 = vector.load %arg1[%c0_1, %c0_2] : memref<16x128xf32, #tpu.memory_space<vmem>>, vector<16x128xf32>
    %cst = arith.constant dense<0.000000e+00> : vector<8x128xf32>
    %2 = tpu.matmul %0, %1, %cst {dimension_numbers = #tpu.dot_dimension_numbers<[1], [0], [0], [1], [0, 0, 1, 1], [], []>} : vector<8x16xf32>, vector<16x128xf32>, vector<8x128xf32> -> vector<8x128xf32>
    %c0_3 = arith.constant 0 : index
    %c0_4 = arith.constant 0 : index
    %3 = vector.load %arg2[%c0_3, %c0_4] : memref<1x128xf32, #tpu.memory_space<vmem>>, vector<1x128xf32>
    %4 = vector.broadcast %3 : vector<1x128xf32> to vector<8x128xf32>
    %5 = arith.addf %2, %4 : vector<8x128xf32>
    %cst_5 = arith.constant 0.000000e+00 : f32
    %6 = vector.broadcast %cst_5 : f32 to vector<8x128xf32>
    %7 = arith.maximumf %5, %6 : vector<8x128xf32>
    %c0_6 = arith.constant 0 : index
    %c0_7 = arith.constant 0 : index
    %8 = vector.load %arg3[%c0_6, %c0_7] : memref<128x128xf32, #tpu.memory_space<vmem>>, vector<128x128xf32>
    %cst_8 = arith.constant dense<0.000000e+00> : vector<8x128xf32>
    %9 = tpu.matmul %7, %8, %cst_8 {dimension_numbers = #tpu.dot_dimension_numbers<[1], [0], [0], [1], [0, 0, 1, 1], [], []>} : vector<8x128xf32>, vector<128x128xf32>, vector<8x128xf32> -> vector<8x128xf32>
    %c0_9 = arith.constant 0 : index
    %c0_10 = arith.constant 0 : index
    %10 = vector.load %arg4[%c0_9, %c0_10] : memref<1x128xf32, #tpu.memory_space<vmem>>, vector<1x128xf32>
    %11 = vector.broadcast %10 : vector<1x128xf32> to vector<8x128xf32>
    %12 = arith.addf %9, %11 : vector<8x128xf32>
    %13 = arith.negf %12 : vector<8x128xf32>
    %14 = math.exp %13 : vector<8x128xf32>
    %cst_11 = arith.constant 1.000000e+00 : f32
    %15 = vector.broadcast %cst_11 : f32 to vector<8x128xf32>
    %16 = arith.addf %15, %14 : vector<8x128xf32>
    %17 = arith.divf %15, %16 : vector<8x128xf32>
    %c0_12 = arith.constant 0 : index
    %c0_13 = arith.constant 0 : index
    %18 = vector.load %arg5[%c0_12, %c0_13] : memref<8x128xf32, #tpu.memory_space<vmem>>, vector<8x128xf32>
    tpu.vector_store %arg5[%c0_12, %c0_13], %17 {strides = array<i32>} : memref<8x128xf32, #tpu.memory_space<vmem>>, vector<8x128xf32>,
    return
  }
}

</mosaic_0001>

<llo_original>
// kernel: tpu_custom_call.1
$region0: #{tpu_custom_call.1}
  #allocation0 [shape = 'u32[]', space=smem, size = 0x4, offset = 0x4, fixed_abs, tag = 'smem constant byte address 0x4 - core index']
  #allocation1 [shape = 'u32[144,128]{1,0:T(1,128)}', space=vmem, size = 0x12000, scoped, tag = 'internal scratch']
  %s0 = inlined_call_operand.hbm [shape: f32[8,16], index: 0, kind: input, shape index: {}]
  %s1 = inlined_call_operand.hbm [shape: f32[16,128], index: 1, kind: input, shape index: {}]
  %s2 = inlined_call_operand.vmem [shape: f32[1,128], index: 2, kind: input, shape index: {}]
  %s3 = inlined_call_operand.hbm [shape: f32[128,128], index: 3, kind: input, shape index: {}]
  %s4 = inlined_call_operand.vmem [shape: f32[1,128], index: 4, kind: input, shape index: {}]
  %s5 = inlined_call_operand.hbm [shape: f32[8,128], index: 5, kind: output, shape index: {}]
  %s6 = sld [smem:[#allocation0]]
  $region42: #{tpu_custom_call.1} parent=0
    _
  %s8 = ssub.s32 1, %s6
  %s9 = scalar_select 0, %s8, %s6
  $region1: #{tpu_custom_call.1} parent=0
    #allocation2 [shape = 'u8[4096]{0}', space=vmem, size = 0x1000, scoped, tag = 'input window, operand 0, single buffered']
    #allocation3 [shape = 's32[1]{0}', space=sflag, size = 0x4, scoped, tag = 'scoped memory for tpu_custom_call.1']
    #allocation4 [shape = 's32[1]{0}', space=sflag, size = 0x4, scoped, tag = 'scoped memory for tpu_custom_call.1']
    #allocation5 [shape = 'u8[8192]{0}', space=vmem, size = 0x2000, scoped, tag = 'input window, operand 1, single buffered']
    #allocation6 [shape = 's32[1]{0}', space=sflag, size = 0x4, scoped, tag = 'scoped memory for tpu_custom_call.1']
    #allocation7 [shape = 'u8[65536]{0}', space=vmem, size = 0x10000, scoped, tag = 'input window, operand 3, single buffered']
    #allocation8 [shape = 'u8[4096]{0}', space=vmem, size = 0x1000, scoped, tag = 'output window, operand 0, single buffered']
    %10 = vsyncpa [#allocation3], 0
    %11 = vsyncpa [#allocation6], 0
    %12 = vsyncpa [#allocation4], 0
    // Predicated region
    $region2: #{tpu_custom_call.1} parent=1 // pred_check
      _
    $region3: #{tpu_custom_call.1} parent=1 // pred_check_branch
      %14 = sbr.rel (0) target = $region5
    $region4: #{tpu_custom_call.1} parent=1 // pred_region
      %s16 = ssub.s32 128, 128
      %17 = vsyncadd [#allocation3], %s16
      %s19 = sshll.u32 [#allocation2], 4
      %s20 = int_to_ptr.vmem [resolvable:$true] %s19
      %22 = dma.hbm_to_vmem [thread:$0]  %s0, 128, %s20, [#allocation3]
    $region5: #{tpu_custom_call.1} parent=1 // pred_fallthru
      _
    // Predicated region
    $region6: #{tpu_custom_call.1} parent=1 // pred_check
      _
    $region7: #{tpu_custom_call.1} parent=1 // pred_check_branch
      %24 = sbr.rel (0) target = $region9
    $region8: #{tpu_custom_call.1} parent=1 // pred_region
      %s26 = ssub.s32 256, 256
      %27 = vsyncadd [#allocation6], %s26
      %s28 = sshll.u32 [#allocation5], 4
      %s29 = int_to_ptr.vmem [resolvable:$true] %s28
      %34 = dma.hbm_to_vmem [thread:$0]  %s1, 256, %s29, [#allocation6], 128, 128, 8
    $region9: #{tpu_custom_call.1} parent=1 // pred_fallthru
      _
    // Predicated region
    $region10: #{tpu_custom_call.1} parent=1 // pred_check
      _
    $region11: #{tpu_custom_call.1} parent=1 // pred_check_branch
      %36 = sbr.rel (0) target = $region13
    $region12: #{tpu_custom_call.1} parent=1 // pred_region
      _
    $region13: #{tpu_custom_call.1} parent=1 // pred_fallthru
      _
    // Predicated region
    $region14: #{tpu_custom_call.1} parent=1 // pred_check
      _
    $region15: #{tpu_custom_call.1} parent=1 // pred_check_branch
      %38 = sbr.rel (0) target = $region17
    $region16: #{tpu_custom_call.1} parent=1 // pred_region
      %s40 = ssub.s32 2048, 2048
      %41 = vsyncadd [#allocation6], %s40
      %s42 = sshll.u32 [#allocation7], 4
      %s43 = int_to_ptr.vmem [resolvable:$true] %s42
      %48 = dma.hbm_to_vmem [thread:$0]  %s3, 2048, %s43, [#allocation6], 128, 128, 8
    $region17: #{tpu_custom_call.1} parent=1 // pred_fallthru
      _
    // Predicated region
    $region18: #{tpu_custom_call.1} parent=1 // pred_check
      _
    $region19: #{tpu_custom_call.1} parent=1 // pred_check_branch
      %50 = sbr.rel (0) target = $region21
    $region20: #{tpu_custom_call.1} parent=1 // pred_region
      _
    $region21: #{tpu_custom_call.1} parent=1 // pred_fallthru
      _
    // Predicated region
    $region22: #{tpu_custom_call.1} parent=1 // pred_check
      _
    $region23: #{tpu_custom_call.1} parent=1 // pred_check_branch
      %52 = sbr.rel (0) target = $region25
    $region24: #{tpu_custom_call.1} parent=1 // pred_region
      %53 = dma.done [#allocation3], 128
    $region25: #{tpu_custom_call.1} parent=1 // pred_fallthru
      _
    // Predicated region
    $region26: #{tpu_custom_call.1} parent=1 // pred_check
      _
    $region27: #{tpu_custom_call.1} parent=1 // pred_check_branch
      %55 = sbr.rel (0) target = $region29
    $region28: #{tpu_custom_call.1} parent=1 // pred_region
      %56 = dma.done [#allocation6], 256
    $region29: #{tpu_custom_call.1} parent=1 // pred_fallthru
      _
    // Predicated region
    $region30: #{tpu_custom_call.1} parent=1 // pred_check
      _
    $region31: #{tpu_custom_call.1} parent=1 // pred_check_branch
      %58 = sbr.rel (0) target = $region33
    $region32: #{tpu_custom_call.1} parent=1 // pred_region
      %59 = dma.done [#allocation6], 2048
    $region33: #{tpu_custom_call.1} parent=1 // pred_fallthru
      _
    %v60 = vld [vmem:[#allocation2] sm:$0xff]
    %v61 = vld [vmem:[#allocation5] sm:$0xff]
    %v62 = vld [vmem:[#allocation5 + $0x8] sm:$0xff]
    %v63 = vld [vmem:[%s2] sm:$0x1]
    %v65 = vlaneseq
    %v66 = vshrl.u32 %v65, 7
    %v67 = vsub.s32 0, %v66
    %v68 = vrot.slane %v63, %v67
    %vm70 = vcmask 130048
    %v72 = vsel %vm70, %v60, 0
    %74 = vmatprep.subr.mxu0 0.0
    %75 = vmatpush1.msra.mxu0 %v61
    %76 = vmatprep.subr.mxu0 0.0
    %77 = vmatpush1.msra.mxu0 %v62
    %78 = vmatprep.subr.mxu0 0.0
    %79 = vmatpush1.msra.mxu0 0.0
    %80 = vmatprep.subr.mxu0 0.0
    %81 = vmatpush1.msra.mxu0 0.0
    %82 = vmatprep.subr.mxu0 0.0
    %83 = vmatpush1.msra.mxu0 0.0
    %84 = vmatprep.subr.mxu0 0.0
    %85 = vmatpush1.msra.mxu0 0.0
    %86 = vmatprep.subr.mxu0 0.0
    %87 = vmatpush1.msra.mxu0 0.0
    %88 = vmatprep.subr.mxu0 0.0
    %89 = vmatpush1.msra.mxu0 0.0
    %90 = vmatprep.subr.mxu0 0.0
    %91 = vmatpush1.msra.mxu0 0.0
    %92 = vmatprep.subr.mxu0 0.0
    %93 = vmatpush1.msra.mxu0 0.0
    %94 = vmatprep.subr.mxu0 0.0
    %95 = vmatpush1.msra.mxu0 0.0
    %96 = vmatprep.subr.mxu0 0.0
    %97 = vmatpush1.msra.mxu0 0.0
    %98 = vmatprep.subr.mxu0 0.0
    %99 = vmatpush1.msra.mxu0 0.0
    %100 = vmatprep.subr.mxu0 0.0
    %101 = vmatpush1.msra.mxu0 0.0
    %102 = vmatprep.subr.mxu0 0.0
    %103 = vmatpush1.msra.mxu0 0.0
    %104 = vmatprep.subr.mxu0 0.0
    %105 = vmatpush1.msra.mxu0 0.0
    %106 = vmatprep.subr.mxu0 0.0
    %107 = vmatpush1.msra.mxu0 0.0
    %108 = vmatprep.subr.mxu0 0.0
    %109 = vmatpush1.msra.mxu0 0.0
    %110 = vmatprep.subr.mxu0 0.0
    %111 = vmatpush1.msra.mxu0 0.0
    %112 = vmatprep.subr.mxu0 0.0
    %113 = vmatpush1.msra.mxu0 0.0
    %114 = vmatprep.subr.mxu0 0.0
    %115 = vmatpush1.msra.mxu0 0.0
    %116 = vmatprep.subr.mxu0 0.0
    %117 = vmatpush1.msra.mxu0 0.0
    %118 = vmatprep.subr.mxu0 0.0
    %119 = vmatpush1.msra.mxu0 0.0
    %120 = vmatprep.subr.mxu0 0.0
    %121 = vmatpush1.msra.mxu0 0.0
    %122 = vmatprep.subr.mxu0 0.0
    %123 = vmatpush1.msra.mxu0 0.0
    %124 = vmatprep.subr.mxu0 0.0
    %125 = vmatpush1.msra.mxu0 0.0
    %126 = vmatprep.subr.mxu0 0.0
    %127 = vmatpush1.msra.mxu0 0.0
    %128 = vmatprep.subr.mxu0 0.0
    %129 = vmatpush1.msra.mxu0 0.0
    %130 = vmatprep.subr.mxu0 0.0
    %131 = vmatpush1.msra.mxu0 0.0
    %132 = vmatprep.subr.mxu0 0.0
    %133 = vmatpush1.msra.mxu0 0.0
    %134 = vmatprep.subr.mxu0 0.0
    %135 = vmatpush1.msra.mxu0 0.0
    %136 = vmatprep.subr.mxu0 0.0
    %137 = vmatpush1.msra.mxu0 0.0
    %138 = vmatprep.mubr.f32.mxu0 0.0
    %139 = vmatmul.mubr.f32.gmra.mrb[0].mxu0 %v72
    %v140 = vpop.f32.mrb[0].mxu0
    %v141 = vadd.f32 %v68, %v140
    %v142 = vpop.f32.mrb[0].mxu0
    %143 = vdwg.mxu0
    %v144 = vmax.f32 %v141, 0.0
    %v145 = vld [vmem:[#allocation7] sm:$0xff]
    %v146 = vld [vmem:[#allocation7 + $0x8] sm:$0xff]
    %v147 = vld [vmem:[#allocation7 + $0x10] sm:$0xff]
    %v148 = vld [vmem:[#allocation7 + $0x18] sm:$0xff]
    %v149 = vld [vmem:[#allocation7 + $0x20] sm:$0xff]
    %v150 = vld [vmem:[#allocation7 + $0x28] sm:$0xff]
    %v151 = vld [vmem:[#allocation7 + $0x30] sm:$0xff]
    %v152 = vld [vmem:[#allocation7 + $0x38] sm:$0xff]
    %v153 = vld [vmem:[#allocation7 + $0x40] sm:$0xff]
    %v154 = vld [vmem:[#allocation7 + $0x48] sm:$0xff]
    %v155 = vld [vmem:[#allocation7 + $0x50] sm:$0xff]
    %v156 = vld [vmem:[#allocation7 + $0x58] sm:$0xff]
    %v157 = vld [vmem:[#allocation7 + $0x60] sm:$0xff]
    %v158 = vld [vmem:[#allocation7 + $0x68] sm:$0xff]
    %v159 = vld [vmem:[#allocation7 + $0x70] sm:$0xff]
    %v160 = vld [vmem:[#allocation7 + $0x78] sm:$0xff]
    %v161 = vld [vmem:[%s4] sm:$0x1]
    %v163 = vlaneseq
    %v164 = vshrl.u32 %v163, 7
    %v165 = vsub.s32 0, %v164
    %v166 = vrot.slane %v161, %v165
    %168 = vmatprep.subr.mxu0 0.0
    %169 = vmatpush1.msra.mxu0 %v145
    %170 = vmatprep.subr.mxu0 0.0
    %171 = vmatpush1.msra.mxu0 %v146
    %172 = vmatprep.subr.mxu0 0.0
    %173 = vmatpush1.msra.mxu0 %v147
    %174 = vmatprep.subr.mxu0 0.0
    %175 = vmatpush1.msra.mxu0 %v148
    %176 = vmatprep.subr.mxu0 0.0
    %177 = vmatpush1.msra.mxu0 %v149
    %178 = vmatprep.subr.mxu0 0.0
    %179 = vmatpush1.msra.mxu0 %v150
    %180 = vmatprep.subr.mxu0 0.0
    %181 = vmatpush1.msra.mxu0 %v151
    %182 = vmatprep.subr.mxu0 0.0
    %183 = vmatpush1.msra.mxu0 %v152
    %184 = vmatprep.subr.mxu0 0.0
    %185 = vmatpush1.msra.mxu0 %v153
    %186 = vmatprep.subr.mxu0 0.0
    %187 = vmatpush1.msra.mxu0 %v154
    %188 = vmatprep.subr.mxu0 0.0
    %189 = vmatpush1.msra.mxu0 %v155
    %190 = vmatprep.subr.mxu0 0.0
    %191 = vmatpush1.msra.mxu0 %v156
    %192 = vmatprep.subr.mxu0 0.0
    %193 = vmatpush1.msra.mxu0 %v157
    %194 = vmatprep.subr.mxu0 0.0
    %195 = vmatpush1.msra.mxu0 %v158
    %196 = vmatprep.subr.mxu0 0.0
    %197 = vmatpush1.msra.mxu0 %v159
    %198 = vmatprep.subr.mxu0 0.0
    %199 = vmatpush1.msra.mxu0 %v160
    %200 = vmatprep.subr.mxu0 0.0
    %201 = vmatpush1.msra.mxu0 0.0
    %202 = vmatprep.subr.mxu0 0.0
    %203 = vmatpush1.msra.mxu0 0.0
    %204 = vmatprep.subr.mxu0 0.0
    %205 = vmatpush1.msra.mxu0 0.0
    %206 = vmatprep.subr.mxu0 0.0
    %207 = vmatpush1.msra.mxu0 0.0
    %208 = vmatprep.subr.mxu0 0.0
    %209 = vmatpush1.msra.mxu0 0.0
    %210 = vmatprep.subr.mxu0 0.0
    %211 = vmatpush1.msra.mxu0 0.0
    %212 = vmatprep.subr.mxu0 0.0
    %213 = vmatpush1.msra.mxu0 0.0
    %214 = vmatprep.subr.mxu0 0.0
    %215 = vmatpush1.msra.mxu0 0.0
    %216 = vmatprep.subr.mxu0 0.0
    %217 = vmatpush1.msra.mxu0 0.0
    %218 = vmatprep.subr.mxu0 0.0
    %219 = vmatpush1.msra.mxu0 0.0
    %220 = vmatprep.subr.mxu0 0.0
    %221 = vmatpush1.msra.mxu0 0.0
    %222 = vmatprep.subr.mxu0 0.0
    %223 = vmatpush1.msra.mxu0 0.0
    %224 = vmatprep.subr.mxu0 0.0
    %225 = vmatpush1.msra.mxu0 0.0
    %226 = vmatprep.subr.mxu0 0.0
    %227 = vmatpush1.msra.mxu0 0.0
    %228 = vmatprep.subr.mxu0 0.0
    %229 = vmatpush1.msra.mxu0 0.0
    %230 = vmatprep.subr.mxu0 0.0
    %231 = vmatpush1.msra.mxu0 0.0
    %232 = vmatprep.mubr.f32.mxu0 0.0
    %233 = vmatmul.mubr.f32.gmra.mrb[0].mxu0 %v144
    %v234 = vpop.f32.mrb[0].mxu0
    %v235 = vadd.f32 %v166, %v234
    %v236 = vpop.f32.mrb[0].mxu0
    %237 = vdwg.mxu0
    %v238 = vxor.u32 %v235, 2147483648
    %v239 = vmul.f32 %v238, 1.442695
    %v240 = vpow.pop %v239
    %v241 = vadd.f32 %v240, 1.0
    %v242 = vrcp.pop %v241
    %v243 = vmul.f32 1.0, %v242
    %244 = vst [vmem:[#allocation8] sm:$0xff] %v243
    // Predicated region
    $region34: #{tpu_custom_call.1} parent=1 // pred_check
      _
    $region35: #{tpu_custom_call.1} parent=1 // pred_check_branch
      %246 = sbr.rel (0) target = $region37
    $region36: #{tpu_custom_call.1} parent=1 // pred_region
      %s248 = ssub.s32 128, 128
      %249 = vsyncadd [#allocation4], %s248
      %s251 = sshll.u32 [#allocation8], 4
      %s252 = int_to_ptr.vmem [resolvable:$true] %s251
      %254 = dma.vmem_to_hbm [thread:$0]  %s252, 128, %s5, [#allocation4]
    $region37: #{tpu_custom_call.1} parent=1 // pred_fallthru
      _
    // Predicated region
    $region38: #{tpu_custom_call.1} parent=1 // pred_check
      _
    $region39: #{tpu_custom_call.1} parent=1 // pred_check_branch
      %256 = sbr.rel (0) target = $region41
    $region40: #{tpu_custom_call.1} parent=1 // pred_region
      %257 = dma.done [#allocation4], 128
    $region41: #{tpu_custom_call.1} parent=1 // pred_fallthru
      _
    %258 = vsyncpa [#allocation3], 1
    %259 = vsyncpa [#allocation6], 1
    %260 = vsyncpa [#allocation4], 1

</llo_original>
